<compile_context>
chip_gen: v6e
topology: v6e:2x2x1
jax: 0.10.0
libtpu: 0.0.40
codegen_flags: <defaults>
</compile_context>

<pallas_src>
import functools

import jax
import jax.numpy as jnp
from jax import lax
from jax.experimental import pallas as pl
from jax.experimental.pallas import tpu as pltpu


def _hash_loss_kernel(f_ref, c_ref, s_ref, hash_ref, quant_ref,
                      *, n_rows, tm, code_length):
    f = f_ref[...]                                   # (tm, K) native dtype
    c = c_ref[...]                                   # (M, K)  native dtype
    s = s_ref[...].astype(jnp.float32)               # (tm, M)

    # F @ C^T on the MXU: contract the last dim of each operand (no c.T).
    fc = lax.dot_general(f, c, (((1,), (1,)), ((), ())),
                         preferred_element_type=jnp.float32)   # (tm, M)

    f32 = f.astype(jnp.float32)

    # Mask rows past the logical batch (ragged tail from padding N to tiles).
    base = pl.program_id(0) * tm
    row_ids = lax.broadcasted_iota(jnp.int32, (tm, 1), 0) + base
    valid = row_ids < n_rows                          # (tm, 1) bool

    diff = jnp.float32(code_length) * s - fc          # (tm, M)
    diff = jnp.where(valid, diff, 0.0)

    qd = jnp.abs(f32) - jnp.float32(1.0)              # (tm, K)
    qd = jnp.where(valid, qd, 0.0)

    # Reduce only over the sublane (row) axis; keep partials lane-resident.
    hash_ref[...] = jnp.sum(diff * diff, axis=0, keepdims=True)[None]    # (1,1,M)
    quant_ref[...] = jnp.sum(qd * qd, axis=0, keepdims=True)[None]       # (1,1,K)


def hash_loss(F, C, S, *, code_length, gamma, tm=256, vmem_limit_bytes=None):
    """Pallas implementation of Hash_Loss.forward.  Returns a scalar float32."""
    N, K = F.shape
    M, Kc = C.shape
    assert K == Kc and S.shape == (N, M)

    # Large row tile (multiple of 8), clamped to the (padded) batch size.
    tm = max(8, min(tm, ((N + 7) // 8) * 8))
    num_tiles = pl.cdiv(N, tm)
    n_pad = num_tiles * tm
    if n_pad != N:
        F = jnp.pad(F, ((0, n_pad - N), (0, 0)))
        S = jnp.pad(S, ((0, n_pad - N), (0, 0)))

    kernel = functools.partial(
        _hash_loss_kernel, n_rows=N, tm=tm, code_length=code_length)

    hash_parts, quant_parts = pl.pallas_call(
        kernel,
        out_shape=(
            jax.ShapeDtypeStruct((num_tiles, 1, M), jnp.float32),
            jax.ShapeDtypeStruct((num_tiles, 1, K), jnp.float32),
        ),
        grid_spec=pltpu.PrefetchScalarGridSpec(
            num_scalar_prefetch=0,
            grid=(num_tiles,),
            in_specs=[
                pl.BlockSpec((tm, K), lambda i: (i, 0)),    # F tile
                pl.BlockSpec((M, K), lambda i: (0, 0)),     # full C (loop-invariant)
                pl.BlockSpec((tm, M), lambda i: (i, 0)),    # S tile
            ],
            out_specs=[
                pl.BlockSpec((1, 1, M), lambda i: (i, 0, 0)),   # per-tile hash partial
                pl.BlockSpec((1, 1, K), lambda i: (i, 0, 0)),   # per-tile quant partial
            ],
        ),
        compiler_params=pltpu.CompilerParams(
            dimension_semantics=("parallel",),
            vmem_limit_bytes=vmem_limit_bytes,
        ),
    )(F, C, S)

    total = jnp.sum(hash_parts) + jnp.float32(gamma) * jnp.sum(quant_parts)
    return total / jnp.float32(N * M)


def hash_loss_ref(F, C, S, *, code_length, gamma):
    F = F.astype(jnp.float32)
    C = C.astype(jnp.float32)
    S = S.astype(jnp.float32)
    hash_l = jnp.sum((code_length * S - F @ C.T) ** 2)
    quant_l = jnp.sum((jnp.abs(F) - 1.0) ** 2)
    return (hash_l + gamma * quant_l) / (F.shape[0] * C.shape[0])


if __name__ == "__main__":
    code_length = 32     # hash code length K
    gamma = 0.2
    M = 8                # number of anchor codes in C

    key = jax.random.PRNGKey(0)

    # Case 1: tile-aligned batch.
    N1 = 16
    k1, k2, k3, k4, k5, k6 = jax.random.split(key, 6)
    F1 = jax.random.normal(k1, (N1, code_length), dtype=jnp.float32)
    C1 = jnp.sign(jax.random.normal(k2, (M, code_length), dtype=jnp.float32))
    S1 = jnp.where(jax.random.uniform(k3, (N1, M)) > 0.5, 1.0, -1.0).astype(jnp.float32)

    out1 = hash_loss(F1, C1, S1, code_length=code_length, gamma=gamma, tm=256)
    out1 = jax.block_until_ready(out1)
    ref1 = hash_loss_ref(F1, C1, S1, code_length=code_length, gamma=gamma)
    assert jnp.allclose(out1, ref1, rtol=1e-5, atol=1e-5), (out1, ref1)

    # Case 2: ragged batch (exercises cdiv grid + padding + row masking).
    N2 = 52
    F2 = jax.random.normal(k4, (N2, code_length), dtype=jnp.float32)
    C2 = jnp.sign(jax.random.normal(k5, (M, code_length), dtype=jnp.float32))
    S2 = jnp.where(jax.random.uniform(k6, (N2, M)) > 0.5, 1.0, -1.0).astype(jnp.float32)

    out2 = hash_loss(F2, C2, S2, code_length=code_length, gamma=gamma, tm=16)
    out2 = jax.block_until_ready(out2)
    ref2 = hash_loss_ref(F2, C2, S2, code_length=code_length, gamma=gamma)
    assert jnp.allclose(out2, ref2, rtol=1e-5, atol=1e-5), (out2, ref2)

    print("KERNEL_OK")
</pallas_src>

<mosaic_0001>
module attributes {stable_mosaic.version = 11 : i64} {
  func.func @_hash_loss_kernel(%arg0: i32, %arg1: memref<16x32xf32, #tpu.memory_space<vmem>>, %arg2: memref<8x32xf32, #tpu.memory_space<vmem>>, %arg3: memref<16x8xf32, #tpu.memory_space<vmem>>, %arg4: memref<1x1x8xf32, #tpu.memory_space<vmem>>, %arg5: memref<1x1x32xf32, #tpu.memory_space<vmem>>) attributes {dimension_semantics = [#tpu.dimension_semantics<parallel>], iteration_bounds = array<i64: 1>, scalar_prefetch = 0 : i64, scratch_operands = 0 : i64, tpu.core_type = #tpu.core_type<tc>, window_params = [{transform_indices = @transform_0, window_bounds = array<i64: 16, 32>}, {pipeline_mode = #tpu.pipeline_mode<synchronous>, transform_indices = @transform_1, window_bounds = array<i64: 8, 32>}, {transform_indices = @transform_2, window_bounds = array<i64: 16, 8>}, {transform_indices = @transform_3, window_bounds = array<i64: 1, 1, 8>}, {transform_indices = @transform_4, window_bounds = array<i64: 1, 1, 32>}]} {
    %c0 = arith.constant 0 : index
    %c0_0 = arith.constant 0 : index
    %0 = vector.load %arg1[%c0, %c0_0] : memref<16x32xf32, #tpu.memory_space<vmem>>, vector<16x32xf32>
    %c0_1 = arith.constant 0 : index
    %c0_2 = arith.constant 0 : index
    %1 = vector.load %arg2[%c0_1, %c0_2] : memref<8x32xf32, #tpu.memory_space<vmem>>, vector<8x32xf32>
    %c0_3 = arith.constant 0 : index
    %c0_4 = arith.constant 0 : index
    %2 = vector.load %arg3[%c0_3, %c0_4] : memref<16x8xf32, #tpu.memory_space<vmem>>, vector<16x8xf32>
    %cst = arith.constant dense<0.000000e+00> : vector<16x8xf32>
    %3 = tpu.matmul %0, %1, %cst {dimension_numbers = #tpu.dot_dimension_numbers<[1], [1], [0], [0], [0, 0, 1, 0], [], []>} : vector<16x32xf32>, vector<8x32xf32>, vector<16x8xf32> -> vector<16x8xf32>
    %c16_i32 = arith.constant 16 : i32
    %4 = arith.muli %arg0, %c16_i32 : i32
    %5 = tpu.iota {dimensions = array<i32: 0>} : vector<16x1xi32>
    %6 = vector.broadcast %4 : i32 to vector<16x1xi32>
    %7 = arith.addi %5, %6 : vector<16x1xi32>
    %c16_i32_5 = arith.constant 16 : i32
    %8 = vector.broadcast %c16_i32_5 : i32 to vector<16x1xi32>
    %9 = arith.cmpi slt, %7, %8 : vector<16x1xi32>
    %cst_6 = arith.constant 3.200000e+01 : f32
    %10 = vector.broadcast %cst_6 : f32 to vector<16x8xf32>
    %11 = arith.mulf %10, %2 : vector<16x8xf32>
    %12 = arith.subf %11, %3 : vector<16x8xf32>
    %cst_7 = arith.constant 0.000000e+00 : f32
    %13 = vector.shape_cast %9 : vector<16x1xi1> to vector<16x1xi1>
    %14 = vector.broadcast %13 : vector<16x1xi1> to vector<16x8xi1>
    %15 = vector.broadcast %cst_7 : f32 to vector<16x8xf32>
    %16 = arith.select %14, %12, %15 : vector<16x8xi1>, vector<16x8xf32>
    %17 = math.absf %0 : vector<16x32xf32>
    %cst_8 = arith.constant 1.000000e+00 : f32
    %18 = vector.broadcast %cst_8 : f32 to vector<16x32xf32>
    %19 = arith.subf %17, %18 : vector<16x32xf32>
    %cst_9 = arith.constant 0.000000e+00 : f32
    %20 = vector.shape_cast %9 : vector<16x1xi1> to vector<16x1xi1>
    %21 = vector.broadcast %20 : vector<16x1xi1> to vector<16x32xi1>
    %22 = vector.broadcast %cst_9 : f32 to vector<16x32xf32>
    %23 = arith.select %21, %19, %22 : vector<16x32xi1>, vector<16x32xf32>
    %24 = arith.mulf %16, %16 : vector<16x8xf32>
    %cst_10 = arith.constant dense<0.000000e+00> : vector<8xf32>
    %25 = vector.multi_reduction <add>, %24, %cst_10 [0] : vector<16x8xf32> to vector<8xf32>
    %26 = vector.shape_cast %25 : vector<8xf32> to vector<1x8xf32>
    %27 = vector.shape_cast %26 : vector<1x8xf32> to vector<1x1x8xf32>
    %c0_11 = arith.constant 0 : index
    %c0_12 = arith.constant 0 : index
    %c0_13 = arith.constant 0 : index
    %28 = vector.load %arg4[%c0_11, %c0_12, %c0_13] : memref<1x1x8xf32, #tpu.memory_space<vmem>>, vector<1x1x8xf32>
    tpu.vector_store %arg4[%c0_11, %c0_12, %c0_13], %27 {strides = array<i32>} : memref<1x1x8xf32, #tpu.memory_space<vmem>>, vector<1x1x8xf32>,
    %29 = arith.mulf %23, %23 : vector<16x32xf32>
    %cst_14 = arith.constant dense<0.000000e+00> : vector<32xf32>
    %30 = vector.multi_reduction <add>, %29, %cst_14 [0] : vector<16x32xf32> to vector<32xf32>
    %31 = vector.shape_cast %30 : vector<32xf32> to vector<1x32xf32>
    %32 = vector.shape_cast %31 : vector<1x32xf32> to vector<1x1x32xf32>
    %c0_15 = arith.constant 0 : index
    %c0_16 = arith.constant 0 : index
    %c0_17 = arith.constant 0 : index
    %33 = vector.load %arg5[%c0_15, %c0_16, %c0_17] : memref<1x1x32xf32, #tpu.memory_space<vmem>>, vector<1x1x32xf32>
    tpu.vector_store %arg5[%c0_15, %c0_16, %c0_17], %32 {strides = array<i32>} : memref<1x1x32xf32, #tpu.memory_space<vmem>>, vector<1x1x32xf32>,
    return
  }
  func.func @transform_0(%arg0: i32) -> (i32, i32) {
    %c0_i32 = arith.constant 0 : i32
    %c0_i32_0 = arith.constant 0 : i32
    return %arg0, %c0_i32 : i32, i32
  }
  func.func @transform_1(%arg0: i32) -> (i32, i32) {
    %c0_i32 = arith.constant 0 : i32
    %c0_i32_0 = arith.constant 0 : i32
    %c0_i32_1 = arith.constant 0 : i32
    return %c0_i32, %c0_i32_0 : i32, i32
  }
  func.func @transform_2(%arg0: i32) -> (i32, i32) {
    %c0_i32 = arith.constant 0 : i32
    %c0_i32_0 = arith.constant 0 : i32
    return %arg0, %c0_i32 : i32, i32
  }
  func.func @transform_3(%arg0: i32) -> (i32, i32, i32) {
    %c0_i32 = arith.constant 0 : i32
    %c0_i32_0 = arith.constant 0 : i32
    %c0_i32_1 = arith.constant 0 : i32
    return %arg0, %c0_i32, %c0_i32_0 : i32, i32, i32
  }
  func.func @transform_4(%arg0: i32) -> (i32, i32, i32) {
    %c0_i32 = arith.constant 0 : i32
    %c0_i32_0 = arith.constant 0 : i32
    %c0_i32_1 = arith.constant 0 : i32
    return %arg0, %c0_i32, %c0_i32_0 : i32, i32, i32
  }
}

</mosaic_0001>

<llo_original>
// kernel: tpu_custom_call.1
$region0: #{tpu_custom_call.1}
  #allocation0 [shape = 'u32[]', space=smem, size = 0x4, offset = 0x4, fixed_abs, tag = 'smem constant byte address 0x4 - core index']
  #allocation1 [shape = 'u32[144,128]{1,0:T(1,128)}', space=vmem, size = 0x12000, scoped, tag = 'internal scratch']
  %s0 = inlined_call_operand.vmem [shape: f32[16,32], index: 0, kind: input, shape index: {}]
  %s1 = inlined_call_operand.vmem [shape: f32[8,32], index: 1, kind: input, shape index: {}]
  %s2 = inlined_call_operand.vmem [shape: f32[16,8], index: 2, kind: input, shape index: {}]
  %s3 = inlined_call_operand.hbm [shape: f32[1,1,8], index: 3, kind: output, shape index: {0}]
  %s4 = inlined_call_operand.hbm [shape: f32[1,1,32], index: 4, kind: output, shape index: {1}]
  %5 = xla_tuple %s3, %s4
  %s6 = sld [smem:[#allocation0]]
  $region30: #{tpu_custom_call.1} parent=0
    _
  %s8 = ssub.s32 1, %s6
  %s9 = scalar_select 0, %s8, %s6
  $region1: #{tpu_custom_call.1} parent=0
    #allocation2 [shape = 'u8[512]{0}', space=vmem, size = 0x400, scoped, tag = 'output window, operand 0, single buffered']
    #allocation3 [shape = 's32[1]{0}', space=sflag, size = 0x4, scoped, tag = 'scoped memory for tpu_custom_call.1']
    #allocation4 [shape = 'u8[512]{0}', space=vmem, size = 0x400, scoped, tag = 'output window, operand 1, single buffered']
    #allocation5 [shape = 's32[1]{0}', space=sflag, size = 0x4, scoped, tag = 'scoped memory for tpu_custom_call.1']
    %10 = vsyncpa [#allocation3], 0
    %11 = vsyncpa [#allocation5], 0
    // Predicated region
    $region2: #{tpu_custom_call.1} parent=1 // pred_check
      _
    $region3: #{tpu_custom_call.1} parent=1 // pred_check_branch
      %13 = sbr.rel (0) target = $region5
    $region4: #{tpu_custom_call.1} parent=1 // pred_region
      _
    $region5: #{tpu_custom_call.1} parent=1 // pred_fallthru
      _
    // Predicated region
    $region6: #{tpu_custom_call.1} parent=1 // pred_check
      _
    $region7: #{tpu_custom_call.1} parent=1 // pred_check_branch
      %15 = sbr.rel (0) target = $region9
    $region8: #{tpu_custom_call.1} parent=1 // pred_region
      _
    $region9: #{tpu_custom_call.1} parent=1 // pred_fallthru
      _
    // Predicated region
    $region10: #{tpu_custom_call.1} parent=1 // pred_check
      _
    $region11: #{tpu_custom_call.1} parent=1 // pred_check_branch
      %17 = sbr.rel (0) target = $region13
    $region12: #{tpu_custom_call.1} parent=1 // pred_region
      _
    $region13: #{tpu_custom_call.1} parent=1 // pred_fallthru
      _
    %v18 = vld [vmem:[%s0] sm:$0xff]
    %v19 = vld [vmem:[%s0 + $0x8] sm:$0xff]
    %v20 = vld [vmem:[%s1] sm:$0xff]
    %v21 = vld [vmem:[%s2] sm:$0xff]
    %v22 = vld [vmem:[%s2 + $0x8] sm:$0xff]
    %vm23 = vcmask 261120
    %v25 = vsel %vm23, %v18, 0
    %v28 = vsel %vm23, %v19, 0
    %v31 = vsel %vm23, %v20, 0
    %33 = vmatprep.subr.mxu0 0.0
    %34 = vmatpush1.xpose.msra.mxu0 0.0
    %35 = vmatprep.subr.mxu0 0.0
    %36 = vmatpush1.xpose.msra.mxu0 0.0
    %37 = vmatprep.subr.mxu0 0.0
    %38 = vmatpush1.xpose.msra.mxu0 0.0
    %39 = vmatprep.subr.mxu0 0.0
    %40 = vmatpush1.xpose.msra.mxu0 0.0
    %41 = vmatprep.subr.mxu0 0.0
    %42 = vmatpush1.xpose.msra.mxu0 0.0
    %43 = vmatprep.subr.mxu0 0.0
    %44 = vmatpush1.xpose.msra.mxu0 0.0
    %45 = vmatprep.subr.mxu0 0.0
    %46 = vmatpush1.xpose.msra.mxu0 0.0
    %47 = vmatprep.subr.mxu0 0.0
    %48 = vmatpush1.xpose.msra.mxu0 0.0
    %49 = vmatprep.subr.mxu0 0.0
    %50 = vmatpush1.xpose.msra.mxu0 0.0
    %51 = vmatprep.subr.mxu0 0.0
    %52 = vmatpush1.xpose.msra.mxu0 0.0
    %53 = vmatprep.subr.mxu0 0.0
    %54 = vmatpush1.xpose.msra.mxu0 0.0
    %55 = vmatprep.subr.mxu0 0.0
    %56 = vmatpush1.xpose.msra.mxu0 0.0
    %57 = vmatprep.subr.mxu0 0.0
    %58 = vmatpush1.xpose.msra.mxu0 0.0
    %59 = vmatprep.subr.mxu0 0.0
    %60 = vmatpush1.xpose.msra.mxu0 0.0
    %61 = vmatprep.subr.mxu0 0.0
    %62 = vmatpush1.xpose.msra.mxu0 0.0
    %63 = vmatprep.subr.mxu0 0.0
    %64 = vmatpush1.xpose.msra.mxu0 %v31
    %65 = vmatprep.subr.mxu0 0.0
    %66 = vmatpush2.xpose.msra.mxu0 0.0
    %67 = vmatprep.subr.mxu0 0.0
    %68 = vmatpush2.xpose.msra.mxu0 0.0
    %69 = vmatprep.subr.mxu0 0.0
    %70 = vmatpush2.xpose.msra.mxu0 0.0
    %71 = vmatprep.subr.mxu0 0.0
    %72 = vmatpush2.xpose.msra.mxu0 0.0
    %73 = vmatprep.subr.mxu0 0.0
    %74 = vmatpush2.xpose.msra.mxu0 0.0
    %75 = vmatprep.subr.mxu0 0.0
    %76 = vmatpush2.xpose.msra.mxu0 0.0
    %77 = vmatprep.subr.mxu0 0.0
    %78 = vmatpush2.xpose.msra.mxu0 0.0
    %79 = vmatprep.subr.mxu0 0.0
    %80 = vmatpush2.xpose.msra.mxu0 0.0
    %81 = vmatprep.subr.mxu0 0.0
    %82 = vmatpush2.xpose.msra.mxu0 0.0
    %83 = vmatprep.subr.mxu0 0.0
    %84 = vmatpush2.xpose.msra.mxu0 0.0
    %85 = vmatprep.subr.mxu0 0.0
    %86 = vmatpush2.xpose.msra.mxu0 0.0
    %87 = vmatprep.subr.mxu0 0.0
    %88 = vmatpush2.xpose.msra.mxu0 0.0
    %89 = vmatprep.subr.mxu0 0.0
    %90 = vmatpush2.xpose.msra.mxu0 0.0
    %91 = vmatprep.subr.mxu0 0.0
    %92 = vmatpush2.xpose.msra.mxu0 0.0
    %93 = vmatprep.subr.mxu0 0.0
    %94 = vmatpush2.xpose.msra.mxu0 0.0
    %95 = vmatprep.subr.mxu0 0.0
    %96 = vmatpush2.xpose.msra.mxu0 0.0
    %97 = vmatprep.mubr.f32.mxu0 0.0
    %98 = vmatmul.mubr.f32.gmra.mxu0 %v25
    %v99 = vpop.f32.mrf.mxu0
    %v100 = vadd.f32 0.0, %v99
    %v101 = vpop.f32.mrf.mxu0
    %102 = vmatprep.mubr.f32.mxu0 0.0
    %103 = vmatmul.mubr.f32.gmra.mxu0 %v28
    %v104 = vpop.f32.mrf.mxu0
    %v105 = vadd.f32 0.0, %v104
    %v106 = vpop.f32.mrf.mxu0
    %107 = vdwg.mxu0
    %s108 = smul.u32 0, 16
    %v109 = vlaneseq
    %v110 = vshrl.u32 %v109, 7
    %v111 = vadd.s32 %v110, 8
    %v112 = vstv %s108
    %v113 = vadd.s32 %v110, %v112
    %v114 = vadd.s32 %v111, %v112
    %vm115 = vcmp.lt.s32.totalorder %v113, 16
    %vm116 = vcmp.lt.s32.totalorder %v114, 16
    %v117 = vmul.f32 %v21, 32.0
    %v118 = vmul.f32 %v22, 32.0
    %v119 = vsub.f32 %v117, %v100
    %v120 = vsub.f32 %v118, %v105
    %v121 = vsel %vm115, 1, 0
    %v122 = vsel %vm116, 1, 0
    %vm123 = vcmp.eq.s32.totalorder %v121, 1
    %vm124 = vcmp.eq.s32.totalorder %v122, 1
    %v125 = vsel %vm123, %v119, 0.0
    %v126 = vsel %vm124, %v120, 0.0
    %v127 = vand.u32 2147483647, %v18
    %v128 = vand.u32 2147483647, %v19
    %v129 = vsub.f32 %v127, 1.0
    %v130 = vsub.f32 %v128, 1.0
    %v131 = vsel %vm123, %v129, 0.0
    %v132 = vsel %vm124, %v130, 0.0
    %v133 = vmul.f32 %v125, %v125
    %v134 = vmul.f32 %v126, %v126
    %vm135 = vcmask 64512
    %v136 = vsel %vm135, %v133, 0.0
    %v137 = vsel %vm135, %v134, 0.0
    %v138 = vadd.f32 %v136, %v137
    %v139 = vrot.slane %v138, 4
    %v140 = vadd.f32 %v138, %v139
    %v141 = vrot.slane %v140, 2
    %v142 = vadd.f32 %v140, %v141
    %v143 = vrot.slane %v142, 1
    %v144 = vadd.f32 %v142, %v143
    %vm145 = vcmask 57344
    %146 = vst.msk [vmem:[#allocation2] sm:$0x1] %vm145, %v144
    %v147 = vmul.f32 %v131, %v131
    %v148 = vmul.f32 %v132, %v132
    %v149 = vsel %vm23, %v147, 0.0
    %v150 = vsel %vm23, %v148, 0.0
    %v151 = vadd.f32 %v149, %v150
    %v152 = vrot.slane %v151, 4
    %v153 = vadd.f32 %v151, %v152
    %v154 = vrot.slane %v153, 2
    %v155 = vadd.f32 %v153, %v154
    %v156 = vrot.slane %v155, 1
    %v157 = vadd.f32 %v155, %v156
    %vm158 = vcmask 253952
    %159 = vst.msk [vmem:[#allocation4] sm:$0x1] %vm158, %v157
    // Predicated region
    $region14: #{tpu_custom_call.1} parent=1 // pred_check
      _
    $region15: #{tpu_custom_call.1} parent=1 // pred_check_branch
      %161 = sbr.rel (0) target = $region17
    $region16: #{tpu_custom_call.1} parent=1 // pred_region
      %s163 = ssub.s32 16, 16
      %164 = vsyncadd [#allocation3], %s163
      %s166 = sshll.u32 [#allocation2], 4
      %s167 = int_to_ptr.vmem [resolvable:$true] %s166
      %169 = dma.vmem_to_hbm [thread:$0]  %s167, 16, %s3, [#allocation3]
    $region17: #{tpu_custom_call.1} parent=1 // pred_fallthru
      _
    // Predicated region
    $region18: #{tpu_custom_call.1} parent=1 // pred_check
      _
    $region19: #{tpu_custom_call.1} parent=1 // pred_check_branch
      %171 = sbr.rel (0) target = $region21
    $region20: #{tpu_custom_call.1} parent=1 // pred_region
      %s173 = ssub.s32 16, 16
      %174 = vsyncadd [#allocation5], %s173
      %s176 = sshll.u32 [#allocation4], 4
      %s177 = int_to_ptr.vmem [resolvable:$true] %s176
      %179 = dma.vmem_to_hbm [thread:$0]  %s177, 16, %s4, [#allocation5]
    $region21: #{tpu_custom_call.1} parent=1 // pred_fallthru
      _
    // Predicated region
    $region22: #{tpu_custom_call.1} parent=1 // pred_check
      _
    $region23: #{tpu_custom_call.1} parent=1 // pred_check_branch
      %181 = sbr.rel (0) target = $region25
    $region24: #{tpu_custom_call.1} parent=1 // pred_region
      %182 = dma.done [#allocation3], 16
    $region25: #{tpu_custom_call.1} parent=1 // pred_fallthru
      _
    // Predicated region
    $region26: #{tpu_custom_call.1} parent=1 // pred_check
      _
    $region27: #{tpu_custom_call.1} parent=1 // pred_check_branch
      %184 = sbr.rel (0) target = $region29
    $region28: #{tpu_custom_call.1} parent=1 // pred_region
      %185 = dma.done [#allocation5], 16
    $region29: #{tpu_custom_call.1} parent=1 // pred_fallthru
      _
    %186 = vsyncpa [#allocation3], 1
    %187 = vsyncpa [#allocation5], 1

</llo_original>
